<compile_context>
chip_gen: v5e
topology: v5e:2x2
jax: 0.10.0
libtpu: 0.0.40
codegen_flags: <defaults>
</compile_context>

<pallas_src>
import jax
import jax.numpy as jnp
from jax import lax
from jax.experimental import pallas as pl
from jax.experimental.pallas import tpu as pltpu


def _critic_kernel(s_ref, a_ref, w1s_ref, w1a_ref, b1_ref,
                   w2_ref, b2_ref, w3_ref, b3_ref, o_ref):
    # Layer 1: fused "concat" -- split W1 by input rows, two MXU pushes.
    h1 = jnp.dot(s_ref[...], w1s_ref[...], preferred_element_type=jnp.float32)
    h1 = h1 + jnp.dot(a_ref[...], w1a_ref[...], preferred_element_type=jnp.float32)
    h1 = jnp.maximum(h1 + b1_ref[...], 0.0).astype(w2_ref.dtype)

    # Layer 2: Linear + ReLU (bias/ReLU in f32, cast back for the next MXU op).
    h2 = jnp.dot(h1, w2_ref[...], preferred_element_type=jnp.float32)
    h2 = jnp.maximum(h2 + b2_ref[...], 0.0).astype(w3_ref.dtype)

    # Layer 3: (1, H) x (TB, H) contracting on H -> (1, TB).  Batch lands on
    # the lane axis (lane-dense, unmasked stores) and the transposed
    # contraction avoids materializing h2.T through the XLU every grid step.
    q = lax.dot_general(
        w3_ref[...], h2,
        dimension_numbers=(((1,), (1,)), ((), ())),
        preferred_element_type=jnp.float32)
    # b3 is a single scalar living in SMEM.
    o_ref[...] = (q + b3_ref[0, 0]).astype(o_ref.dtype)


def _round_up(x, m):
    return ((x + m - 1) // m) * m


def critic_forward(state, action, params, *, block_b=None):
    """Fused 3-layer MLP critic.  state: (B, S), action: (B, A) -> (B, 1)."""
    w1s, w1a, b1, w2, b2, w3, b3 = params
    B, S = state.shape
    A = action.shape[1]
    H = w2.shape[0]

    # Batch tile selection:
    #  * B <= 128: one full-array tile (nothing useful to split).
    #  * B  > 128: fat tiles (up to 2048 rows) to amortize per-step overhead,
    #    but no larger than ceil(B/2) rounded up to 128 so the grid has at
    #    least 2 steps and v7x's 2 TensorCores both get work.
    if block_b is None:
        if B <= 128:
            block_b = B
        else:
            block_b = min(2048, _round_up(pl.cdiv(B, 2), 128))
    if block_b >= B:
        block_b = B
    else:
        assert block_b % 128 == 0, "tiled block_b must be a multiple of 128"
    grid = (pl.cdiv(B, block_b),)

    def _const(shape):
        # Same block every grid step -> loaded once, stays resident in VMEM.
        return pl.BlockSpec(shape, lambda i: (0, 0))

    q_row = pl.pallas_call(
        _critic_kernel,
        out_shape=jax.ShapeDtypeStruct((1, B), jnp.float32),
        grid_spec=pltpu.PrefetchScalarGridSpec(
            num_scalar_prefetch=0,
            grid=grid,
            in_specs=[
                pl.BlockSpec((block_b, S), lambda i: (i, 0)),   # state tile
                pl.BlockSpec((block_b, A), lambda i: (i, 0)),   # action tile
                _const((S, H)),     # W1 rows for state
                _const((A, H)),     # W1 rows for action
                _const((1, H)),     # b1 (f32)
                _const((H, H)),     # W2
                _const((1, H)),     # b2 (f32)
                _const((1, H)),     # W3 (PyTorch (out=1, in=H) row layout)
                pl.BlockSpec(memory_space=pltpu.SMEM),          # b3 scalar
            ],
            out_specs=pl.BlockSpec((1, block_b), lambda i: (0, i)),
        ),
        compiler_params=pltpu.CompilerParams(
            dimension_semantics=("parallel",)),
    )(state, action, w1s, w1a, b1, w2, b2, w3, b3)

    # (1, B) row-major is bit-identical to (B, 1): reshape is a no-copy bitcast.
    return q_row.reshape(B, 1)


def init_critic_params(key, state_dim, hidden_dim, action_dim, dtype=jnp.float32):
    """Synthetic init matching nn.Linear fan-in uniform.

    Weights are stored as (in, out) so the kernel computes x @ W directly,
    except W3 which keeps the PyTorch (out=1, in=hidden) row layout.  W1 is
    pre-split into its state rows and action rows (fused concat).  Biases are
    kept in f32 regardless of the weight dtype (v5e has no bf16 VALU).
    """
    in_dim = state_dim + action_dim
    ks = jax.random.split(key, 6)

    def uniform(k, shape, fan_in):
        bound = 1.0 / jnp.sqrt(jnp.asarray(fan_in, jnp.float32))
        return jax.random.uniform(k, shape, jnp.float32, -bound, bound)

    w1 = uniform(ks[0], (in_dim, hidden_dim), in_dim).astype(dtype)
    w1s, w1a = w1[:state_dim], w1[state_dim:]
    b1 = uniform(ks[1], (1, hidden_dim), in_dim)
    w2 = uniform(ks[2], (hidden_dim, hidden_dim), hidden_dim).astype(dtype)
    b2 = uniform(ks[3], (1, hidden_dim), hidden_dim)
    w3 = uniform(ks[4], (1, hidden_dim), hidden_dim).astype(dtype)
    b3 = uniform(ks[5], (1, 1), hidden_dim)
    return (w1s, w1a, b1, w2, b2, w3, b3)


def critic_reference(state, action, params):
    """Pure-JAX reference mirroring the PyTorch forward (with the concat)."""
    w1s, w1a, b1, w2, b2, w3, b3 = params
    x = jnp.concatenate([state, action], axis=1).astype(jnp.float32)
    w1 = jnp.concatenate([w1s, w1a], axis=0).astype(jnp.float32)
    h1 = jnp.maximum(x @ w1 + b1, 0.0)
    h2 = jnp.maximum(h1 @ w2.astype(jnp.float32) + b2, 0.0)
    return h2 @ w3.astype(jnp.float32).T + b3


if __name__ == "__main__":
    batch, state_dim, hidden_dim, action_dim = 8, 16, 32, 4

    key = jax.random.PRNGKey(0)
    k_params, k_s1, k_a1, k_s2, k_a2, k_s3, k_a3 = jax.random.split(key, 7)
    params = init_critic_params(k_params, state_dim, hidden_dim, action_dim)

    # 1) Small-shape check (single grid point, full-array blocks).
    state = jax.random.normal(k_s1, (batch, state_dim), jnp.float32)
    action = jax.random.normal(k_a1, (batch, action_dim), jnp.float32)
    q = jax.block_until_ready(critic_forward(state, action, params))
    q_ref = critic_reference(state, action, params)
    assert q.shape == (batch, 1)
    assert jnp.allclose(q, q_ref, atol=1e-4, rtol=1e-4)

    # 2) Batch-tiled path: B=2048 -> block_b=1024, a 2-step "parallel" grid
    #    (both v7x TensorCores busy), fat tiles amortize per-step overhead,
    #    weights VMEM-resident across steps, lane-dense output tiles.
    big_b = 2048
    state2 = jax.random.normal(k_s2, (big_b, state_dim), jnp.float32)
    action2 = jax.random.normal(k_a2, (big_b, action_dim), jnp.float32)
    q2 = jax.block_until_ready(critic_forward(state2, action2, params))
    q2_ref = critic_reference(state2, action2, params)
    assert q2.shape == (big_b, 1)
    assert jnp.allclose(q2, q2_ref, atol=1e-4, rtol=1e-4)

    # 3) bf16 weights/activations (MXU-native on v6e/v7x), f32 accumulation.
    #    Looser tolerance vs. the f32 reference, per the review.
    params_bf16 = init_critic_params(k_params, state_dim, hidden_dim,
                                     action_dim, dtype=jnp.bfloat16)
    state3 = jax.random.normal(k_s3, (512, state_dim), jnp.float32)
    action3 = jax.random.normal(k_a3, (512, action_dim), jnp.float32)
    q3 = jax.block_until_ready(
        critic_forward(state3.astype(jnp.bfloat16),
                       action3.astype(jnp.bfloat16), params_bf16))
    q3_ref = critic_reference(state3, action3, params_bf16)
    assert q3.shape == (512, 1)
    assert jnp.allclose(q3, q3_ref, atol=5e-2, rtol=5e-2)

    print("KERNEL_OK")
</pallas_src>

<mosaic_0001>
module attributes {stable_mosaic.version = 11 : i64} {
  func.func @_critic_kernel(%arg0: i32, %arg1: memref<8x16xf32, #tpu.memory_space<vmem>>, %arg2: memref<8x4xf32, #tpu.memory_space<vmem>>, %arg3: memref<16x32xf32, #tpu.memory_space<vmem>>, %arg4: memref<4x32xf32, #tpu.memory_space<vmem>>, %arg5: memref<1x32xf32, #tpu.memory_space<vmem>>, %arg6: memref<32x32xf32, #tpu.memory_space<vmem>>, %arg7: memref<1x32xf32, #tpu.memory_space<vmem>>, %arg8: memref<1x32xf32, #tpu.memory_space<vmem>>, %arg9: memref<1x1xf32, #tpu.memory_space<smem>>, %arg10: memref<1x8xf32, #tpu.memory_space<vmem>>) attributes {dimension_semantics = [#tpu.dimension_semantics<parallel>], iteration_bounds = array<i64: 1>, scalar_prefetch = 0 : i64, scratch_operands = 0 : i64, tpu.core_type = #tpu.core_type<tc>, window_params = [{transform_indices = @transform_0, window_bounds = array<i64: 8, 16>}, {transform_indices = @transform_1, window_bounds = array<i64: 8, 4>}, {pipeline_mode = #tpu.pipeline_mode<synchronous>, transform_indices = @transform_2, window_bounds = array<i64: 16, 32>}, {pipeline_mode = #tpu.pipeline_mode<synchronous>, transform_indices = @transform_3, window_bounds = array<i64: 4, 32>}, {pipeline_mode = #tpu.pipeline_mode<synchronous>, transform_indices = @transform_4, window_bounds = array<i64: 1, 32>}, {pipeline_mode = #tpu.pipeline_mode<synchronous>, transform_indices = @transform_5, window_bounds = array<i64: 32, 32>}, {pipeline_mode = #tpu.pipeline_mode<synchronous>, transform_indices = @transform_6, window_bounds = array<i64: 1, 32>}, {pipeline_mode = #tpu.pipeline_mode<synchronous>, transform_indices = @transform_7, window_bounds = array<i64: 1, 32>}, {transform_indices = @transform_8, window_bounds = array<i64: 1, 1>}, {transform_indices = @transform_9, window_bounds = array<i64: 1, 8>}]} {
    %c0 = arith.constant 0 : index
    %c0_0 = arith.constant 0 : index
    %0 = vector.load %arg1[%c0, %c0_0] : memref<8x16xf32, #tpu.memory_space<vmem>>, vector<8x16xf32>
    %c0_1 = arith.constant 0 : index
    %c0_2 = arith.constant 0 : index
    %1 = vector.load %arg3[%c0_1, %c0_2] : memref<16x32xf32, #tpu.memory_space<vmem>>, vector<16x32xf32>
    %cst = arith.constant dense<0.000000e+00> : vector<8x32xf32>
    %2 = tpu.matmul %0, %1, %cst {dimension_numbers = #tpu.dot_dimension_numbers<[1], [0], [0], [1], [0, 0, 1, 1], [], []>} : vector<8x16xf32>, vector<16x32xf32>, vector<8x32xf32> -> vector<8x32xf32>
    %c0_3 = arith.constant 0 : index
    %c0_4 = arith.constant 0 : index
    %3 = vector.load %arg2[%c0_3, %c0_4] : memref<8x4xf32, #tpu.memory_space<vmem>>, vector<8x4xf32>
    %c0_5 = arith.constant 0 : index
    %c0_6 = arith.constant 0 : index
    %4 = vector.load %arg4[%c0_5, %c0_6] : memref<4x32xf32, #tpu.memory_space<vmem>>, vector<4x32xf32>
    %cst_7 = arith.constant dense<0.000000e+00> : vector<8x32xf32>
    %5 = tpu.matmul %3, %4, %cst_7 {dimension_numbers = #tpu.dot_dimension_numbers<[1], [0], [0], [1], [0, 0, 1, 1], [], []>} : vector<8x4xf32>, vector<4x32xf32>, vector<8x32xf32> -> vector<8x32xf32>
    %6 = arith.addf %2, %5 : vector<8x32xf32>
    %c0_8 = arith.constant 0 : index
    %c0_9 = arith.constant 0 : index
    %7 = vector.load %arg5[%c0_8, %c0_9] : memref<1x32xf32, #tpu.memory_space<vmem>>, vector<1x32xf32>
    %8 = vector.broadcast %7 : vector<1x32xf32> to vector<8x32xf32>
    %9 = arith.addf %6, %8 : vector<8x32xf32>
    %cst_10 = arith.constant 0.000000e+00 : f32
    %10 = vector.broadcast %cst_10 : f32 to vector<8x32xf32>
    %11 = arith.maximumf %9, %10 : vector<8x32xf32>
    %c0_11 = arith.constant 0 : index
    %c0_12 = arith.constant 0 : index
    %12 = vector.load %arg6[%c0_11, %c0_12] : memref<32x32xf32, #tpu.memory_space<vmem>>, vector<32x32xf32>
    %cst_13 = arith.constant dense<0.000000e+00> : vector<8x32xf32>
    %13 = tpu.matmul %11, %12, %cst_13 {dimension_numbers = #tpu.dot_dimension_numbers<[1], [0], [0], [1], [0, 0, 1, 1], [], []>} : vector<8x32xf32>, vector<32x32xf32>, vector<8x32xf32> -> vector<8x32xf32>
    %c0_14 = arith.constant 0 : index
    %c0_15 = arith.constant 0 : index
    %14 = vector.load %arg7[%c0_14, %c0_15] : memref<1x32xf32, #tpu.memory_space<vmem>>, vector<1x32xf32>
    %15 = vector.broadcast %14 : vector<1x32xf32> to vector<8x32xf32>
    %16 = arith.addf %13, %15 : vector<8x32xf32>
    %cst_16 = arith.constant 0.000000e+00 : f32
    %17 = vector.broadcast %cst_16 : f32 to vector<8x32xf32>
    %18 = arith.maximumf %16, %17 : vector<8x32xf32>
    %c0_17 = arith.constant 0 : index
    %c0_18 = arith.constant 0 : index
    %19 = vector.load %arg8[%c0_17, %c0_18] : memref<1x32xf32, #tpu.memory_space<vmem>>, vector<1x32xf32>
    %cst_19 = arith.constant dense<0.000000e+00> : vector<1x8xf32>
    %20 = tpu.matmul %19, %18, %cst_19 {dimension_numbers = #tpu.dot_dimension_numbers<[1], [1], [0], [0], [0, 0, 1, 0], [], []>} : vector<1x32xf32>, vector<8x32xf32>, vector<1x8xf32> -> vector<1x8xf32>
    %c0_20 = arith.constant 0 : index
    %c0_21 = arith.constant 0 : index
    %21 = memref.load %arg9[%c0_20, %c0_21] : memref<1x1xf32, #tpu.memory_space<smem>>
    %22 = vector.broadcast %21 : f32 to vector<1x8xf32>
    %23 = arith.addf %20, %22 : vector<1x8xf32>
    %c0_22 = arith.constant 0 : index
    %c0_23 = arith.constant 0 : index
    %24 = vector.load %arg10[%c0_22, %c0_23] : memref<1x8xf32, #tpu.memory_space<vmem>>, vector<1x8xf32>
    tpu.vector_store %arg10[%c0_22, %c0_23], %23 {strides = array<i32>} : memref<1x8xf32, #tpu.memory_space<vmem>>, vector<1x8xf32>,
    return
  }
  func.func @transform_0(%arg0: i32) -> (i32, i32) {
    %c0_i32 = arith.constant 0 : i32
    %c0_i32_0 = arith.constant 0 : i32
    return %arg0, %c0_i32 : i32, i32
  }
  func.func @transform_1(%arg0: i32) -> (i32, i32) {
    %c0_i32 = arith.constant 0 : i32
    %c0_i32_0 = arith.constant 0 : i32
    return %arg0, %c0_i32 : i32, i32
  }
  func.func @transform_2(%arg0: i32) -> (i32, i32) {
    %c0_i32 = arith.constant 0 : i32
    %c0_i32_0 = arith.constant 0 : i32
    %c0_i32_1 = arith.constant 0 : i32
    return %c0_i32, %c0_i32_0 : i32, i32
  }
  func.func @transform_3(%arg0: i32) -> (i32, i32) {
    %c0_i32 = arith.constant 0 : i32
    %c0_i32_0 = arith.constant 0 : i32
    %c0_i32_1 = arith.constant 0 : i32
    return %c0_i32, %c0_i32_0 : i32, i32
  }
  func.func @transform_4(%arg0: i32) -> (i32, i32) {
    %c0_i32 = arith.constant 0 : i32
    %c0_i32_0 = arith.constant 0 : i32
    %c0_i32_1 = arith.constant 0 : i32
    return %c0_i32, %c0_i32_0 : i32, i32
  }
  func.func @transform_5(%arg0: i32) -> (i32, i32) {
    %c0_i32 = arith.constant 0 : i32
    %c0_i32_0 = arith.constant 0 : i32
    %c0_i32_1 = arith.constant 0 : i32
    return %c0_i32, %c0_i32_0 : i32, i32
  }
  func.func @transform_6(%arg0: i32) -> (i32, i32) {
    %c0_i32 = arith.constant 0 : i32
    %c0_i32_0 = arith.constant 0 : i32
    %c0_i32_1 = arith.constant 0 : i32
    return %c0_i32, %c0_i32_0 : i32, i32
  }
  func.func @transform_7(%arg0: i32) -> (i32, i32) {
    %c0_i32 = arith.constant 0 : i32
    %c0_i32_0 = arith.constant 0 : i32
    %c0_i32_1 = arith.constant 0 : i32
    return %c0_i32, %c0_i32_0 : i32, i32
  }
  func.func @transform_8(%arg0: i32) -> (i32, i32) {
    %c0_i32 = arith.constant 0 : i32
    %c0_i32_0 = arith.constant 0 : i32
    %c0_i32_1 = arith.constant 0 : i32
    return %c0_i32, %c0_i32_0 : i32, i32
  }
  func.func @transform_9(%arg0: i32) -> (i32, i32) {
    %c0_i32 = arith.constant 0 : i32
    %c0_i32_0 = arith.constant 0 : i32
    return %c0_i32, %arg0 : i32, i32
  }
}

</mosaic_0001>

<llo_original>
// kernel: tpu_custom_call.1
$region0: #{tpu_custom_call.1}
  #allocation0 [shape = 'u32[]', space=smem, size = 0x4, offset = 0x4, fixed_abs, tag = 'smem constant byte address 0x4 - core index']
  #allocation1 [shape = 'u32[72,128]{1,0:T(1,128)}', space=vmem, size = 0x9000, scoped, tag = 'internal scratch']
  #allocation2 [shape = 'f32[1,1]{1,0:T(1,128)S(6)}', space=smem, size = 0x200, scoped, tag = 'scoped memory for tpu_custom_call.1']
  %s0 = inlined_call_operand.vmem [shape: f32[8,16], index: 0, kind: input, shape index: {}]
  %s1 = inlined_call_operand.vmem [shape: f32[8,4], index: 1, kind: input, shape index: {}]
  %s2 = inlined_call_operand.hbm [shape: f32[16,32], index: 2, kind: input, shape index: {}]
  %s3 = inlined_call_operand.vmem [shape: f32[4,32], index: 3, kind: input, shape index: {}]
  %s4 = inlined_call_operand.vmem [shape: f32[1,32], index: 4, kind: input, shape index: {}]
  %s5 = inlined_call_operand.hbm [shape: f32[32,32], index: 5, kind: input, shape index: {}]
  %s6 = inlined_call_operand.vmem [shape: f32[1,32], index: 6, kind: input, shape index: {}]
  %s7 = inlined_call_operand.vmem [shape: f32[1,32], index: 7, kind: input, shape index: {}]
  %s8 = inlined_call_operand.<no memory space> [shape: f32[1,1], index: 8, kind: input, shape index: {}]
  %s9 = inlined_call_operand.hbm [shape: f32[1,8], index: 9, kind: output, shape index: {}]
  %s10 = sld [smem:[#allocation0]]
  $region54: #{tpu_custom_call.1} parent=0
    _
  %s12 = ssub.s32 1, %s10
  %s13 = scalar_select 0, %s12, %s10
  %14 = sst [smem:[#allocation2]] %s8
  $region1: #{tpu_custom_call.1} parent=0
    #allocation3 [shape = 'u8[8192]{0}', space=vmem, size = 0x2000, scoped, tag = 'input window, operand 2, single buffered']
    #allocation4 [shape = 's32[1]{0}', space=sflag, size = 0x4, scoped, tag = 'scoped memory for tpu_custom_call.1']
    #allocation5 [shape = 's32[1]{0}', space=sflag, size = 0x4, scoped, tag = 'scoped memory for tpu_custom_call.1']
    #allocation6 [shape = 'u8[16384]{0}', space=vmem, size = 0x4000, scoped, tag = 'input window, operand 5, single buffered']
    #allocation7 [shape = 's32[1]{0}', space=sflag, size = 0x4, scoped, tag = 'scoped memory for tpu_custom_call.1']
    #allocation8 [shape = 'u8[512]{0}', space=vmem, size = 0x400, scoped, tag = 'output window, operand 0, single buffered']
    %15 = vsyncpa [#allocation4], 0
    %16 = vsyncpa [#allocation7], 0
    %17 = vsyncpa [#allocation5], 0
    // Predicated region
    $region2: #{tpu_custom_call.1} parent=1 // pred_check
      _
    $region3: #{tpu_custom_call.1} parent=1 // pred_check_branch
      %19 = sbr.rel (0) target = $region5
    $region4: #{tpu_custom_call.1} parent=1 // pred_region
      _
    $region5: #{tpu_custom_call.1} parent=1 // pred_fallthru
      _
    // Predicated region
    $region6: #{tpu_custom_call.1} parent=1 // pred_check
      _
    $region7: #{tpu_custom_call.1} parent=1 // pred_check_branch
      %21 = sbr.rel (0) target = $region9
    $region8: #{tpu_custom_call.1} parent=1 // pred_region
      _
    $region9: #{tpu_custom_call.1} parent=1 // pred_fallthru
      _
    // Predicated region
    $region10: #{tpu_custom_call.1} parent=1 // pred_check
      _
    $region11: #{tpu_custom_call.1} parent=1 // pred_check_branch
      %23 = sbr.rel (0) target = $region13
    $region12: #{tpu_custom_call.1} parent=1 // pred_region
      %25 = vsyncadd [#allocation4], 0
      %s26 = sshll.u32 %s2, 4
      %s27 = int_to_ptr.hbm [resolvable:$true] %s26
      %s28 = sshll.u32 [#allocation3], 4
      %s29 = int_to_ptr.vmem [resolvable:$true] %s28
      %34 = dma.hbm_to_vmem [thread:$0]  %s27, 256, %s29, [#allocation4], 128, 128, 8
    $region13: #{tpu_custom_call.1} parent=1 // pred_fallthru
      _
    // Predicated region
    $region14: #{tpu_custom_call.1} parent=1 // pred_check
      _
    $region15: #{tpu_custom_call.1} parent=1 // pred_check_branch
      %36 = sbr.rel (0) target = $region17
    $region16: #{tpu_custom_call.1} parent=1 // pred_region
      _
    $region17: #{tpu_custom_call.1} parent=1 // pred_fallthru
      _
    // Predicated region
    $region18: #{tpu_custom_call.1} parent=1 // pred_check
      _
    $region19: #{tpu_custom_call.1} parent=1 // pred_check_branch
      %38 = sbr.rel (0) target = $region21
    $region20: #{tpu_custom_call.1} parent=1 // pred_region
      _
    $region21: #{tpu_custom_call.1} parent=1 // pred_fallthru
      _
    // Predicated region
    $region22: #{tpu_custom_call.1} parent=1 // pred_check
      _
    $region23: #{tpu_custom_call.1} parent=1 // pred_check_branch
      %40 = sbr.rel (0) target = $region25
    $region24: #{tpu_custom_call.1} parent=1 // pred_region
      %42 = vsyncadd [#allocation7], 0
      %s43 = sshll.u32 %s5, 4
      %s44 = int_to_ptr.hbm [resolvable:$true] %s43
      %s45 = sshll.u32 [#allocation6], 4
      %s46 = int_to_ptr.vmem [resolvable:$true] %s45
      %51 = dma.hbm_to_vmem [thread:$0]  %s44, 512, %s46, [#allocation7], 128, 128, 8
    $region25: #{tpu_custom_call.1} parent=1 // pred_fallthru
      _
    // Predicated region
    $region26: #{tpu_custom_call.1} parent=1 // pred_check
      _
    $region27: #{tpu_custom_call.1} parent=1 // pred_check_branch
      %53 = sbr.rel (0) target = $region29
    $region28: #{tpu_custom_call.1} parent=1 // pred_region
      _
    $region29: #{tpu_custom_call.1} parent=1 // pred_fallthru
      _
    // Predicated region
    $region30: #{tpu_custom_call.1} parent=1 // pred_check
      _
    $region31: #{tpu_custom_call.1} parent=1 // pred_check_branch
      %55 = sbr.rel (0) target = $region33
    $region32: #{tpu_custom_call.1} parent=1 // pred_region
      _
    $region33: #{tpu_custom_call.1} parent=1 // pred_fallthru
      _
    // Predicated region
    $region34: #{tpu_custom_call.1} parent=1 // pred_check
      _
    $region35: #{tpu_custom_call.1} parent=1 // pred_check_branch
      %57 = sbr.rel (0) target = $region37
    $region36: #{tpu_custom_call.1} parent=1 // pred_region
      _
    $region37: #{tpu_custom_call.1} parent=1 // pred_fallthru
      _
    // Predicated region
    $region38: #{tpu_custom_call.1} parent=1 // pred_check
      _
    $region39: #{tpu_custom_call.1} parent=1 // pred_check_branch
      %59 = sbr.rel (0) target = $region41
    $region40: #{tpu_custom_call.1} parent=1 // pred_region
      %61 = dma.done [#allocation4], 256
    $region41: #{tpu_custom_call.1} parent=1 // pred_fallthru
      _
    // Predicated region
    $region42: #{tpu_custom_call.1} parent=1 // pred_check
      _
    $region43: #{tpu_custom_call.1} parent=1 // pred_check_branch
      %63 = sbr.rel (0) target = $region45
    $region44: #{tpu_custom_call.1} parent=1 // pred_region
      %65 = dma.done [#allocation7], 512
    $region45: #{tpu_custom_call.1} parent=1 // pred_fallthru
      _
    %v66 = vld [vmem:[%s0] sm:$0xff]
    %v67 = vld [vmem:[#allocation3] sm:$0xff]
    %v68 = vld [vmem:[#allocation3 + $0x8] sm:$0xff]
    %v69 = vld [vmem:[%s1] sm:$0xff]
    %v70 = vld [vmem:[%s3] sm:$0xf]
    %vm71 = vcmask 31744
    %v73 = vsel %vm71, %v69, 0
    %vm75 = vcmask 1043456
    %v77 = vsel %vm75, %v70, 0
    %79 = vmatpush.msra.mxu0 0.0
    %80 = vmatpush.msra.mxu0 0.0
    %81 = vmatpush.msra.mxu0 0.0
    %82 = vmatpush.msra.mxu0 0.0
    %83 = vmatpush.msra.mxu0 0.0
    %84 = vmatpush.msra.mxu0 0.0
    %85 = vmatpush.msra.mxu0 0.0
    %86 = vmatpush.msra.mxu0 0.0
    %87 = vmatpush.msra.mxu0 0.0
    %88 = vmatpush.msra.mxu0 0.0
    %89 = vmatpush.msra.mxu0 0.0
    %90 = vmatpush.msra.mxu0 0.0
    %91 = vmatpush.msra.mxu0 0.0
    %92 = vmatpush.msra.mxu0 0.0
    %93 = vmatpush.msra.mxu0 0.0
    %94 = vmatpush.msra.mxu0 %v77
    %95 = vmatmul.f32.gmra.mxu0 %v73
    %v96 = vpop.f32.mrf.mxu0
    %v97 = vadd.f32 0.0, %v96
    %98 = vdwg.mxu0
    %vm99 = vcmask 130048
    %v101 = vsel %vm99, %v66, 0
    %103 = vmatpush.msra.mxu0 0.0
    %104 = vmatpush.msra.mxu0 0.0
    %105 = vmatpush.msra.mxu0 0.0
    %106 = vmatpush.msra.mxu0 0.0
    %107 = vmatpush.msra.mxu0 0.0
    %108 = vmatpush.msra.mxu0 0.0
    %109 = vmatpush.msra.mxu0 0.0
    %110 = vmatpush.msra.mxu0 0.0
    %111 = vmatpush.msra.mxu0 0.0
    %112 = vmatpush.msra.mxu0 0.0
    %113 = vmatpush.msra.mxu0 0.0
    %114 = vmatpush.msra.mxu0 0.0
    %115 = vmatpush.msra.mxu0 0.0
    %116 = vmatpush.msra.mxu0 0.0
    %117 = vmatpush.msra.mxu0 %v68
    %118 = vmatpush.msra.mxu0 %v67
    %119 = vmatmul.f32.gmra.mxu0 %v101
    %v120 = vpop.f32.mrf.mxu0
    %v121 = vadd.f32 %v97, %v120
    %122 = vdwg.mxu0
    %v123 = vld [vmem:[%s4] sm:$0x1]
    %v125 = vperm.slane %v123, 0
    %v127 = vadd.f32 %v121, %v125
    %v128 = vmax.f32 %v127, 0.0
    %v129 = vld [vmem:[#allocation6] sm:$0xff]
    %v130 = vld [vmem:[#allocation6 + $0x8] sm:$0xff]
    %v131 = vld [vmem:[#allocation6 + $0x10] sm:$0xff]
    %v132 = vld [vmem:[#allocation6 + $0x18] sm:$0xff]
    %v133 = vld [vmem:[%s6] sm:$0x1]
    %v135 = vperm.slane %v133, 0
    %vm137 = vcmask 261120
    %v139 = vsel %vm137, %v128, 0
    %141 = vmatpush.msra.mxu0 0.0
    %142 = vmatpush.msra.mxu0 0.0
    %143 = vmatpush.msra.mxu0 0.0
    %144 = vmatpush.msra.mxu0 0.0
    %145 = vmatpush.msra.mxu0 0.0
    %146 = vmatpush.msra.mxu0 0.0
    %147 = vmatpush.msra.mxu0 0.0
    %148 = vmatpush.msra.mxu0 0.0
    %149 = vmatpush.msra.mxu0 0.0
    %150 = vmatpush.msra.mxu0 0.0
    %151 = vmatpush.msra.mxu0 0.0
    %152 = vmatpush.msra.mxu0 0.0
    %153 = vmatpush.msra.mxu0 %v132
    %154 = vmatpush.msra.mxu0 %v131
    %155 = vmatpush.msra.mxu0 %v130
    %156 = vmatpush.msra.mxu0 %v129
    %157 = vmatmul.f32.gmra.mxu0 %v139
    %v158 = vpop.f32.mrf.mxu0
    %v159 = vadd.f32 %v135, %v158
    %160 = vdwg.mxu0
    %v161 = vmax.f32 %v159, 0.0
    %v162 = vld [vmem:[%s7] sm:$0x1]
    %s163 = sld [smem:[#allocation2]]
    %v164 = vstv %s163
    %v166 = vsel %vm137, %v162, 0
    %v169 = vsel %vm137, %v161, 0
    %171 = vmatpush.xpose.msra.mxu0 0.0
    %172 = vmatpush.xpose.msra.mxu0 0.0
    %173 = vmatpush.xpose.msra.mxu0 0.0
    %174 = vmatpush.xpose.msra.mxu0 0.0
    %175 = vmatpush.xpose.msra.mxu0 0.0
    %176 = vmatpush.xpose.msra.mxu0 0.0
    %177 = vmatpush.xpose.msra.mxu0 0.0
    %178 = vmatpush.xpose.msra.mxu0 0.0
    %179 = vmatpush.xpose.msra.mxu0 0.0
    %180 = vmatpush.xpose.msra.mxu0 0.0
    %181 = vmatpush.xpose.msra.mxu0 0.0
    %182 = vmatpush.xpose.msra.mxu0 0.0
    %183 = vmatpush.xpose.msra.mxu0 0.0
    %184 = vmatpush.xpose.msra.mxu0 0.0
    %185 = vmatpush.xpose.msra.mxu0 0.0
    %186 = vmatpush.xpose.msra.mxu0 %v169
    %187 = vmatmul.f32.gmra.mxu0 %v166
    %v188 = vpop.f32.mrf.mxu0
    %v189 = vadd.f32 %v164, %v188
    %190 = vdwg.mxu0
    %vm191 = vcmask 57344
    %192 = vst.msk [vmem:[#allocation8] sm:$0x1] %vm191, %v189
    // Predicated region
    $region46: #{tpu_custom_call.1} parent=1 // pred_check
      _
    $region47: #{tpu_custom_call.1} parent=1 // pred_check_branch
      %194 = sbr.rel (0) target = $region49
    $region48: #{tpu_custom_call.1} parent=1 // pred_region
      %196 = vsyncadd [#allocation5], 0
      %s198 = sshll.u32 [#allocation8], 4
      %s199 = int_to_ptr.vmem [resolvable:$true] %s198
      %s200 = sshll.u32 %s9, 4
      %s201 = int_to_ptr.hbm [resolvable:$true] %s200
      %203 = dma.vmem_to_hbm [thread:$0]  %s199, 16, %s201, [#allocation5]
    $region49: #{tpu_custom_call.1} parent=1 // pred_fallthru
      _
    // Predicated region
    $region50: #{tpu_custom_call.1} parent=1 // pred_check
      _
    $region51: #{tpu_custom_call.1} parent=1 // pred_check_branch
      %205 = sbr.rel (0) target = $region53
    $region52: #{tpu_custom_call.1} parent=1 // pred_region
      %207 = dma.done [#allocation5], 16
    $region53: #{tpu_custom_call.1} parent=1 // pred_fallthru
      _
    %208 = vsyncpa [#allocation4], 1
    %209 = vsyncpa [#allocation7], 1
    %210 = vsyncpa [#allocation5], 1

</llo_original>
